<compile_context>
chip_gen: v7x
topology: tpu7x:2x2x1
jax: 0.10.0
libtpu: 0.0.40
codegen_flags: <defaults>
</compile_context>

<pallas_src>
import jax
import jax.numpy as jnp
from jax.experimental import pallas as pl
from jax.experimental.pallas import tpu as pltpu


# -------------------------------------------------------------------------
# Minimal synthetic "irreps" machinery mirroring _Sortcut.__init__ semantics.
# An irreps spec is a list of (mul, l) pairs; dim of one entry = mul*(2l+1).
# -------------------------------------------------------------------------
def _simplify(irreps):
    out = []
    for mul, l in irreps:
        if out and out[-1][1] == l:
            out[-1] = (out[-1][0] + mul, l)
        else:
            out.append((mul, l))
    return out


def _irrep_dim(mul, l):
    return mul * (2 * l + 1)


def build_sortcut_plan(*irreps_outs):
    """Reproduce _Sortcut.__init__ bookkeeping.

    Returns:
      dim_in:   total input feature dim (sorted irreps_in)
      out_dims: list of output feature dims
      slices:   per-output list of coalesced (start, size) slices into the
                sorted input, in the original per-output irrep order.
    """
    irreps_outs = [_simplify(list(o)) for o in irreps_outs]

    # unsorted concatenated irreps_in + per-output instruction index tuples
    irreps_in = []
    instructions = []
    i = 0
    for irreps_out in irreps_outs:
        irreps_in += irreps_out
        instructions.append(tuple(range(i, i + len(irreps_out))))
        i += len(irreps_out)

    # stable sort by l (e3nn Irreps.sort); p maps old index -> new index
    order = sorted(range(len(irreps_in)), key=lambda k: irreps_in[k][1])
    p = [0] * len(irreps_in)
    for new_idx, old_idx in enumerate(order):
        p[old_idx] = new_idx
    irreps_in_sorted = [irreps_in[k] for k in order]
    instructions = [tuple(p[k] for k in ins) for ins in instructions]

    # channel offsets of each irrep in the sorted input
    offsets = []
    off = 0
    for mul, l in irreps_in_sorted:
        d = _irrep_dim(mul, l)
        offsets.append((off, d))
        off += d
    dim_in = off

    slices = []
    out_dims = []
    for ins in instructions:
        sl = [offsets[k] for k in ins]
        # coalesce adjacent contiguous slices -> fewer lane pieces in-kernel
        merged = []
        for s, d in sl:
            if merged and merged[-1][0] + merged[-1][1] == s:
                merged[-1] = (merged[-1][0], merged[-1][1] + d)
            else:
                merged.append((s, d))
        slices.append([tuple(m) for m in merged])
        out_dims.append(sum(d for _, d in merged))
    return dim_in, out_dims, slices


# -------------------------------------------------------------------------
# Pallas kernel: per row tile, copy each static source slice of x directly
# into its destination lane range of the fused output slab.  No concatenate
# intermediate, no pad lanes, no per-iteration zeros broadcast.
# -------------------------------------------------------------------------
def make_sortcut_copy_kernel(copy_plan):
    # copy_plan: static list of (src_start, dst_start, width)
    def kernel(x_ref, out_ref):
        for src, dst, w in copy_plan:
            out_ref[:, dst:dst + w] = x_ref[:, src:src + w]
    return kernel


def _round_up(x, m):
    return ((x + m - 1) // m) * m


def _vmem_capacity_bytes():
    # v5e/v6e: 128 MiB, v7x: 64 MiB.  Conservative default if query fails.
    try:
        return int(pltpu.get_tpu_info().vmem_capacity_bytes)
    except Exception:
        return 64 << 20


def sortcut_forward(x, *irreps_outs, max_tile_n=2048, use_pallas=None):
    dim_in, out_dims, slices = build_sortcut_plan(*irreps_outs)
    N, D = x.shape
    assert D == dim_in, (D, dim_in)
    assert sum(out_dims) == dim_in  # pure permutation: every channel appears once

    # ---- Fast path 1: every output is a single contiguous slice -> no copy.
    if all(len(sl) == 1 for sl in slices):
        return tuple(x[:, s:s + w] for ((s, w),) in slices)

    itemsize = jnp.dtype(x.dtype).itemsize
    if use_pallas is None:
        # Narrow lane widths (< 128) can never be lane-dense in a Pallas block
        # (masked vst.msk stores, ~4.5x penalty); tiny problems are dominated
        # by launch overhead.  Plain XLA slice/concat wins there.
        use_pallas = (dim_in >= 128) and (N * dim_in * itemsize >= (64 << 10))

    # ---- Fast path 2: XLA fallback for narrow / tiny problems.
    if not use_pallas:
        return tuple(
            jnp.concatenate([x[:, s:s + w] for (s, w) in sl], axis=-1)
            for sl in slices)

    # ---- Pallas path: fused lane-dense output slab [N, dim_in] built by
    #      direct per-slice stores, split into the individual outputs after.
    copy_plan = []
    dst = 0
    for sl in slices:
        for s, w in sl:
            copy_plan.append((s, dst, w))
            dst += w
    out_w = dst  # == dim_in

    # sub-32-bit dtypes pack along sublanes: 8 rows f32, 16 bf16, 32 int8
    sublane = 8 * max(1, 4 // itemsize)

    # VMEM budget derived from the part's actual capacity (~1/3 of physical):
    # v7x (64 MiB) -> ~21 MiB, v5e/v6e (128 MiB) -> ~42 MiB.
    vmem_cap = _vmem_capacity_bytes()
    vmem_budget = min(56 << 20, max(8 << 20, vmem_cap // 3))

    # Row tile: double-buffered (in + out) footprint within the budget.
    bytes_per_row = (dim_in + out_w) * itemsize
    tile_n = (vmem_budget // (2 * bytes_per_row)) // sublane * sublane
    tile_n = max(sublane, min(tile_n, max_tile_n))
    # Target >= ~4 grid steps when N allows: gives the software pipeline room
    # to overlap DMA/compute on 1-TC parts and an even, balanced grid on v7x.
    steps_target = 4
    tile_n = min(tile_n, max(sublane, _round_up(pl.cdiv(N, steps_target), sublane)))

    grid = (pl.cdiv(N, tile_n),)  # partial last block handled by Pallas

    # vmem_limit from the actual double-buffered tile footprint (+ headroom),
    # never above physical capacity.
    footprint = 2 * tile_n * bytes_per_row
    vmem_limit = min(vmem_cap, max(16 << 20, footprint * 5 // 4 + (2 << 20)))

    fused = pl.pallas_call(
        make_sortcut_copy_kernel(copy_plan),
        out_shape=jax.ShapeDtypeStruct((N, out_w), x.dtype),
        grid=grid,
        in_specs=[pl.BlockSpec((tile_n, dim_in), lambda i: (i, 0))],
        out_specs=pl.BlockSpec((tile_n, out_w), lambda i: (i, 0)),
        compiler_params=pltpu.CompilerParams(
            dimension_semantics=("parallel",),
            vmem_limit_bytes=vmem_limit,
        ),
        cost_estimate=pl.CostEstimate(
            flops=0, transcendentals=0,
            bytes_accessed=2 * N * dim_in * itemsize),
    )(x)

    # Split the fused lane-dense slab into the individual outputs (cheap XLA
    # slices outside the kernel).
    outs = []
    off = 0
    for d in out_dims:
        outs.append(fused[:, off:off + d])
        off += d
    return tuple(outs)


# -------------------------------------------------------------------------
# Pure-JAX reference (mirrors Extract: concat of slices of sorted input).
# TODO(synk): add an e3nn-derived golden test; this reference shares the
# plan builder, so it validates the kernel, not the sort bookkeeping itself.
# -------------------------------------------------------------------------
def sortcut_reference(x, *irreps_outs):
    _, _, slices = build_sortcut_plan(*irreps_outs)
    return tuple(
        jnp.concatenate([x[:, s:s + w] for (s, w) in sl], axis=-1)
        for sl in slices)


def _check(outs, refs, out_dims, n):
    for o, r, d in zip(outs, refs, out_dims):
        assert o.shape == (n, d), (o.shape, (n, d))
        assert bool(jnp.array_equal(o, r)), "mismatch vs reference"


if __name__ == "__main__":
    key = jax.random.PRNGKey(0)

    # ---- Case A: wide, interleaved irreps -> Pallas kernel path.
    #   out0 = 32x0e + 16x1e (dim 80), out1 = 24x0e + 8x2e (dim 64)
    #   sorted irreps_in = 32x0e + 24x0e + 16x1e + 8x2e, dim_in = 144 (>=128)
    #   out0 slices: (0,32)+(56,48); out1 slices: (32,24)+(104,40)  (non-contig)
    irr_a0 = [(32, 0), (16, 1)]
    irr_a1 = [(24, 0), (8, 2)]
    dim_a, dims_a, _ = build_sortcut_plan(irr_a0, irr_a1)
    Na = 44  # not a multiple of the row tile -> exercises the partial block
    ka, key = jax.random.split(key)
    xa = jax.random.normal(ka, (Na, dim_a), dtype=jnp.float32)
    outs_a = jax.block_until_ready(
        sortcut_forward(xa, irr_a0, irr_a1, use_pallas=True))
    _check(outs_a, sortcut_reference(xa, irr_a0, irr_a1), dims_a, Na)

    # ---- Case B: each output already one contiguous slice -> zero-copy path.
    irr_b0 = [(4, 0)]
    irr_b1 = [(3, 1)]
    dim_b, dims_b, _ = build_sortcut_plan(irr_b0, irr_b1)
    kb, key = jax.random.split(key)
    xb = jax.random.normal(kb, (16, dim_b), dtype=jnp.float32)
    outs_b = jax.block_until_ready(sortcut_forward(xb, irr_b0, irr_b1))
    _check(outs_b, sortcut_reference(xb, irr_b0, irr_b1), dims_b, 16)

    # ---- Case C: narrow feature width (dim_in = 23 < 128) -> XLA fallback.
    irr_c0 = [(4, 0), (2, 1)]
    irr_c1 = [(3, 0), (2, 2)]
    dim_c, dims_c, _ = build_sortcut_plan(irr_c0, irr_c1)
    kc, key = jax.random.split(key)
    xc = jax.random.normal(kc, (20, dim_c), dtype=jnp.float32)
    outs_c = jax.block_until_ready(sortcut_forward(xc, irr_c0, irr_c1))
    _check(outs_c, sortcut_reference(xc, irr_c0, irr_c1), dims_c, 20)

    print("KERNEL_OK")
</pallas_src>

<mosaic_0001>
module attributes {stable_mosaic.version = 11 : i64} {
  func.func @kernel(%arg0: i32, %arg1: memref<16x144xf32, #tpu.memory_space<vmem>>, %arg2: memref<16x144xf32, #tpu.memory_space<vmem>>) attributes {dimension_semantics = [#tpu.dimension_semantics<parallel>], iteration_bounds = array<i64: 3>, scalar_prefetch = 0 : i64, scratch_operands = 0 : i64, tpu.core_type = #tpu.core_type<tc>, window_params = [{transform_indices = @transform_0, window_bounds = array<i64: 16, 144>}, {transform_indices = @transform_1, window_bounds = array<i64: 16, 144>}]} {
    %c0 = arith.constant 0 : index
    %c0_0 = arith.constant 0 : index
    %0 = vector.load %arg1[%c0, %c0_0] : memref<16x144xf32, #tpu.memory_space<vmem>>, vector<16x32xf32>
    %c0_1 = arith.constant 0 : index
    %c0_2 = arith.constant 0 : index
    %1 = vector.load %arg2[%c0_1, %c0_2] : memref<16x144xf32, #tpu.memory_space<vmem>>, vector<16x32xf32>
    tpu.vector_store %arg2[%c0_1, %c0_2], %0 {strides = array<i32>} : memref<16x144xf32, #tpu.memory_space<vmem>>, vector<16x32xf32>,
    %c0_3 = arith.constant 0 : index
    %c56 = arith.constant 56 : index
    %2 = vector.load %arg1[%c0_3, %c56] : memref<16x144xf32, #tpu.memory_space<vmem>>, vector<16x48xf32>
    %c0_4 = arith.constant 0 : index
    %c32 = arith.constant 32 : index
    %3 = vector.load %arg2[%c0_4, %c32] : memref<16x144xf32, #tpu.memory_space<vmem>>, vector<16x48xf32>
    tpu.vector_store %arg2[%c0_4, %c32], %2 {strides = array<i32>} : memref<16x144xf32, #tpu.memory_space<vmem>>, vector<16x48xf32>,
    %c0_5 = arith.constant 0 : index
    %c32_6 = arith.constant 32 : index
    %4 = vector.load %arg1[%c0_5, %c32_6] : memref<16x144xf32, #tpu.memory_space<vmem>>, vector<16x24xf32>
    %c0_7 = arith.constant 0 : index
    %c80 = arith.constant 80 : index
    %5 = vector.load %arg2[%c0_7, %c80] : memref<16x144xf32, #tpu.memory_space<vmem>>, vector<16x24xf32>
    tpu.vector_store %arg2[%c0_7, %c80], %4 {strides = array<i32>} : memref<16x144xf32, #tpu.memory_space<vmem>>, vector<16x24xf32>,
    %c0_8 = arith.constant 0 : index
    %c104 = arith.constant 104 : index
    %6 = vector.load %arg1[%c0_8, %c104] : memref<16x144xf32, #tpu.memory_space<vmem>>, vector<16x40xf32>
    %c0_9 = arith.constant 0 : index
    %c104_10 = arith.constant 104 : index
    %7 = vector.load %arg2[%c0_9, %c104_10] : memref<16x144xf32, #tpu.memory_space<vmem>>, vector<16x40xf32>
    tpu.vector_store %arg2[%c0_9, %c104_10], %6 {strides = array<i32>} : memref<16x144xf32, #tpu.memory_space<vmem>>, vector<16x40xf32>,
    return
  }
  func.func @transform_0(%arg0: i32) -> (i32, i32) {
    %c0_i32 = arith.constant 0 : i32
    %c0_i32_0 = arith.constant 0 : i32
    return %arg0, %c0_i32 : i32, i32
  }
  func.func @transform_1(%arg0: i32) -> (i32, i32) {
    %c0_i32 = arith.constant 0 : i32
    %c0_i32_0 = arith.constant 0 : i32
    return %arg0, %c0_i32 : i32, i32
  }
}

</mosaic_0001>

<llo_original>
// kernel: tpu_custom_call.1
$region0: #{tpu_custom_call.1}
  #allocation0 [shape = 'u32[]', space=smem, size = 0x4, offset = 0x4, fixed_abs, tag = 'smem constant byte address 0x4 - core index']
  #allocation1 [shape = 'u32[144,128]{1,0:T(1,128)}', space=vmem, size = 0x12000, scoped, tag = 'internal scratch']
  %s0 = inlined_call_operand.hbm [shape: f32[44,144], index: 0, kind: input, shape index: {}]
  %s1 = inlined_call_operand.hbm [shape: f32[44,144], index: 1, kind: output, shape index: {}]
  %s2 = sld [smem:[#allocation0]]
  $region41: #{tpu_custom_call.1} parent=0
    _
  %s4 = ssub.s32 1, %s2
  %s5 = scalar_select 0, %s4, %s2
  $region1: #{tpu_custom_call.1} parent=0
    #allocation2 [shape = 'u8[32768]{0}', space=vmem, size = 0x8000, scoped, tag = 'input window, operand 0']
    #allocation3 [shape = 's32[2]{0}', space=sflag, size = 0x8, scoped, tag = 'scoped memory for tpu_custom_call.1']
    #allocation4 [shape = 's32[2]{0}', space=sflag, size = 0x8, scoped, tag = 'scoped memory for tpu_custom_call.1']
    #allocation5 [shape = 'u8[32768]{0}', space=vmem, size = 0x8000, scoped, tag = 'output window, operand 0']
    %6 = vsyncpa [#allocation3], 0
    %s7 = scalar_lea.sflag [#allocation3], 1
    %8 = vsyncpa %s7, 0
    %9 = vsyncpa [#allocation4], 0
    %s10 = scalar_lea.sflag [#allocation4], 1
    %11 = vsyncpa %s10, 0
    loop: start=0, step=1, limit=5
    $region2: #{tpu_custom_call.1} parent=1 // loop_pre_header
      _
    $region3: #{tpu_custom_call.1} parent=1 // loop_header
      %s13 = sphi 0, %s17
      %p14 = scmp.ge.s32.totalorder %s13, 5
      %s23 = sphi 0, %s25
      %s26 = sphi 0, %s23
      %s27 = sphi 0, %s26
      %s43 = sphi 0, %s27
      %s49 = sphi 0, %s51
      %s52 = sphi 0, %s49
      %s53 = sphi 0, %s52
      %s69 = sphi 0, %s53
    $region4: #{tpu_custom_call.1} parent=1 // loop_header_branch
      %16 = sbr.rel (%p14) target = $region8
    $region5: #{tpu_custom_call.1} parent=1 // loop_body
      %s18 = ssub.s32 %s13, 1
      %s19 = ssub.s32 %s13, 2
      %s20 = sadd.s32 %s13, 1
      %s21 = ssub.s32 %s13, %s20
      %p22 = scmp.eq.s32.totalorder %s21, 0
      %s24 = sadd.s32 %s23, 1
      %s25 = scalar_select %p22, %s23, %s24
      %p28 = pneg %p22
      %p29 = scmp.eq.s32.totalorder %s13, 2
      %p30 = por %p28, %p29
      %p31 = scmp.ne.s32.totalorder %s23, %s26
      %p32 = scmp.eq.s32.totalorder %s13, 0
      %p33 = por %p31, %p32
      %p34 = scmp.ne.s32.totalorder %s23, %s26
      %p35 = scmp.eq.s32.totalorder %s18, 2
      %p36 = por %p34, %p35
      %p37 = scmp.ne.s32.totalorder %s26, %s27
      %p38 = scmp.eq.s32.totalorder %s18, 0
      %p39 = por %p37, %p38
      %p40 = scmp.ne.s32.totalorder %s26, %s27
      %p41 = scmp.eq.s32.totalorder %s19, 2
      %p42 = por %p40, %p41
      %p44 = scmp.ne.s32.totalorder %s27, %s43
      %p45 = scmp.eq.s32.totalorder %s19, 0
      %p46 = por %p44, %p45
      %s47 = ssub.s32 %s13, %s20
      %p48 = scmp.eq.s32.totalorder %s47, 0
      %s50 = sadd.s32 %s49, 1
      %s51 = scalar_select %p48, %s49, %s50
      %p54 = pneg %p48
      %p55 = scmp.eq.s32.totalorder %s13, 2
      %p56 = por %p54, %p55
      %p57 = scmp.ne.s32.totalorder %s49, %s52
      %p58 = scmp.eq.s32.totalorder %s13, 0
      %p59 = por %p57, %p58
      %p60 = scmp.ne.s32.totalorder %s49, %s52
      %p61 = scmp.eq.s32.totalorder %s18, 2
      %p62 = por %p60, %p61
      %p63 = scmp.ne.s32.totalorder %s52, %s53
      %p64 = scmp.eq.s32.totalorder %s18, 0
      %p65 = por %p63, %p64
      %p66 = scmp.ne.s32.totalorder %s52, %s53
      %p67 = scmp.eq.s32.totalorder %s19, 2
      %p68 = por %p66, %p67
      %p70 = scmp.ne.s32.totalorder %s53, %s69
      %p71 = scmp.eq.s32.totalorder %s19, 0
      %p72 = por %p70, %p71
      %p73 = scmp.le.s32.totalorder 1, %s13
      %p74 = scmp.lt.s32.totalorder %s13, 4
      %p75 = pnand %p73, %p74
      %p76 = pneg %p75
      // Predicated region
      $region9: #{tpu_custom_call.1} parent=5 // pred_check
        _
      $region10: #{tpu_custom_call.1} parent=5 // pred_check_branch
        %78 = sbr.rel (%p75) target = $region12
      $region11: #{tpu_custom_call.1} parent=5 // pred_region
        %s79 = ssub.s32 %s13, 1
      $region12: #{tpu_custom_call.1} parent=5 // pred_fallthru
        _
      %p80 = scmp.lt.s32.totalorder %s13, 3
      // Predicated region
      $region13: #{tpu_custom_call.1} parent=5 // pred_check
        %p81 = pneg %p80
      $region14: #{tpu_custom_call.1} parent=5 // pred_check_branch
        %83 = sbr.rel (%p81) target = $region16
      $region15: #{tpu_custom_call.1} parent=5 // pred_region
        // Predicated region
        $region17: #{tpu_custom_call.1} parent=15 // pred_check
          %p84 = pneg %p33
        $region18: #{tpu_custom_call.1} parent=15 // pred_check_branch
          %86 = sbr.rel (%p84) target = $region20
        $region19: #{tpu_custom_call.1} parent=15 // pred_region
          %s87 = sand.u32 %s23, 1
          %s88 = scalar_lea.sflag [#allocation3], %s87
          %s89 = sand.u32 %s23, 1
          %s90 = smul.addr %s89, 32
          %s91 = scalar_lea.vmem [#allocation2], %s90
          %s92 = smul.u32 2, %s13
          %s94 = ssub.s32 512, 512
          %95 = vsyncadd %s88, %s94
          %s96 = smul.addr %s92, 2
          %s97 = smul.addr %s96, 128
          %s98 = scalar_lea.hbm %s0, %s97
          %s99 = sshll.u32 %s91, 4
          %s100 = int_to_ptr.vmem [resolvable:$true] %s99
          %105 = dma.hbm_to_vmem [thread:$0]  %s98, 512, %s100, %s88, 256, 256, 16
        $region20: #{tpu_custom_call.1} parent=15 // pred_fallthru
          _
      $region16: #{tpu_custom_call.1} parent=5 // pred_fallthru
        _
      %p106 = scmp.le.s32.totalorder 1, %s13
      %p107 = scmp.lt.s32.totalorder %s13, 4
      %p108 = pnand %p106, %p107
      %p109 = pneg %p108
      // Predicated region
      $region21: #{tpu_custom_call.1} parent=5 // pred_check
        _
      $region22: #{tpu_custom_call.1} parent=5 // pred_check_branch
        %111 = sbr.rel (%p108) target = $region24
      $region23: #{tpu_custom_call.1} parent=5 // pred_region
        %s112 = ssub.s32 %s13, 1
        %s113 = sand.u32 %s26, 1
        %s114 = scalar_lea.sflag [#allocation3], %s113
        %s115 = sand.u32 %s26, 1
        %s116 = smul.addr %s115, 32
        %s117 = scalar_lea.vmem [#allocation2], %s116
        // Predicated region
        $region25: #{tpu_custom_call.1} parent=23 // pred_check
          %p118 = pneg %p39
        $region26: #{tpu_custom_call.1} parent=23 // pred_check_branch
          %120 = sbr.rel (%p118) target = $region28
        $region27: #{tpu_custom_call.1} parent=23 // pred_region
          %121 = dma.done %s114, 512
        $region28: #{tpu_custom_call.1} parent=23 // pred_fallthru
          _
        %s122 = sand.u32 %s26, 1
        %s123 = scalar_lea.sflag [#allocation3], %s122
        %s124 = sand.u32 %s26, 1
        %s125 = smul.addr %s124, 32
        %s126 = scalar_lea.vmem [#allocation2], %s125
        %p127 = pneg %p39
        %p128 = pneg %p36
        %p129 = pneg %p65
        %p130 = pneg %p62
        %s131 = sand.u32 %s52, 1
        %s132 = scalar_lea.sflag [#allocation4], %s131
        %s133 = sand.u32 %s52, 1
        %s134 = smul.addr %s133, 32
        %s135 = scalar_lea.vmem [#allocation5], %s134
        %s136 = smul.u32 2, %s18
        %s137 = smul.u32 2, %s18
        %v138 = vld [vmem:[%s117] sm:$0xff]
        %v139 = vld [vmem:[%s117 + $0x10] sm:$0xff]
        %vm140 = vcmask 261120
        %141 = vst.msk [vmem:[%s135] sm:$0xff] %vm140, %v138
        %142 = vst.msk [vmem:[%s135 + $0x10] sm:$0xff] %vm140, %v139
        %v143 = vld [vmem:[%s117] sm:$0xff]
        %v144 = vld [vmem:[%s117 + $0x10] sm:$0xff]
        %147 = vrot.lane.b32.xlu0 %v143, 104
        %v148 = vpop.permute.xlu0 %147
        %149 = vrot.lane.b32.xlu0 %v144, 104
        %v150 = vpop.permute.xlu0 %149
        %vm153 = vcmask 654592
        %154 = vst.msk [vmem:[%s135] sm:$0xff] %vm153, %v148
        %155 = vst.msk [vmem:[%s135 + $0x10] sm:$0xff] %vm153, %v150
        %v156 = vld [vmem:[%s117] sm:$0xff]
        %v157 = vld [vmem:[%s117 + $0x10] sm:$0xff]
        %160 = vrot.lane.b32.xlu0 %v156, 48
        %v161 = vpop.permute.xlu0 %160
        %162 = vrot.lane.b32.xlu0 %v157, 48
        %v163 = vpop.permute.xlu0 %162
        %vm166 = vcmask 851584
        %167 = vst.msk [vmem:[%s135] sm:$0xff] %vm166, %v161
        %168 = vst.msk [vmem:[%s135 + $0x10] sm:$0xff] %vm166, %v163
        %v169 = vld [vmem:[%s117] sm:$0xff]
        %v170 = vld [vmem:[%s117 + $0x8] sm:$0xff]
        %v171 = vld [vmem:[%s117 + $0x10] sm:$0xff]
        %v172 = vld [vmem:[%s117 + $0x18] sm:$0xff]
        %vm173 = vcmask 1048384
        %174 = vst.msk [vmem:[%s135] sm:$0xff] %vm173, %v169
        %vm175 = vcmask 130048
        %176 = vst.msk [vmem:[%s135 + $0x8] sm:$0xff] %vm175, %v170
        %177 = vst.msk [vmem:[%s135 + $0x10] sm:$0xff] %vm173, %v171
        %178 = vst.msk [vmem:[%s135 + $0x18] sm:$0xff] %vm175, %v172
        %s179 = sand.u32 %s52, 1
        %s180 = scalar_lea.sflag [#allocation4], %s179
        %s181 = sand.u32 %s52, 1
        %s182 = smul.addr %s181, 32
        %s183 = scalar_lea.vmem [#allocation5], %s182
        // Predicated region
        $region29: #{tpu_custom_call.1} parent=23 // pred_check
          %p184 = pneg %p62
        $region30: #{tpu_custom_call.1} parent=23 // pred_check_branch
          %186 = sbr.rel (%p184) target = $region32
        $region31: #{tpu_custom_call.1} parent=23 // pred_region
          %s187 = smul.u32 2, %s18
          %s189 = ssub.s32 512, 512
          %190 = vsyncadd %s180, %s189
          %s191 = smul.addr %s187, 2
          %s192 = smul.addr %s191, 128
          %s193 = scalar_lea.hbm %s1, %s192
          %s194 = sshll.u32 %s183, 4
          %s195 = int_to_ptr.vmem [resolvable:$true] %s194
          %200 = dma.vmem_to_hbm [thread:$0]  %s195, 512, %s193, %s180, 256, 256, 16
        $region32: #{tpu_custom_call.1} parent=23 // pred_fallthru
          _
      $region24: #{tpu_custom_call.1} parent=5 // pred_fallthru
        _
      %p201 = scmp.le.s32.totalorder 2, %s13
      // Predicated region
      $region33: #{tpu_custom_call.1} parent=5 // pred_check
        %p202 = pneg %p201
      $region34: #{tpu_custom_call.1} parent=5 // pred_check_branch
        %204 = sbr.rel (%p202) target = $region36
      $region35: #{tpu_custom_call.1} parent=5 // pred_region
        %s205 = ssub.s32 %s13, 2
        // Predicated region
        $region37: #{tpu_custom_call.1} parent=35 // pred_check
          %p206 = pneg %p68
        $region38: #{tpu_custom_call.1} parent=35 // pred_check_branch
          %208 = sbr.rel (%p206) target = $region40
        $region39: #{tpu_custom_call.1} parent=35 // pred_region
          %s209 = sand.u32 %s53, 1
          %s210 = scalar_lea.sflag [#allocation4], %s209
          %s211 = sand.u32 %s53, 1
          %s212 = smul.addr %s211, 32
          %s213 = scalar_lea.vmem [#allocation5], %s212
          %214 = dma.done %s210, 512
        $region40: #{tpu_custom_call.1} parent=35 // pred_fallthru
          _
      $region36: #{tpu_custom_call.1} parent=5 // pred_fallthru
        _
    $region6: #{tpu_custom_call.1} parent=1 // loop_footer
      %s17 = sadd.s32 1, %s13
    $region7: #{tpu_custom_call.1} parent=1 // loop_footer_branch
      %12 = sbr.rel target = $region3
    $region8: #{tpu_custom_call.1} parent=1 // loop_exit
      _
    %215 = vsyncpa [#allocation3], 1
    %s216 = scalar_lea.sflag [#allocation3], 1
    %217 = vsyncpa %s216, 1
    %218 = vsyncpa [#allocation4], 1
    %s219 = scalar_lea.sflag [#allocation4], 1
    %220 = vsyncpa %s219, 1

</llo_original>
